<compile_context>
chip_gen: v5e
topology: v5e:2x2
jax: 0.10.0
libtpu: 0.0.40
codegen_flags: <defaults>
</compile_context>

<pallas_src>
import jax
import jax.numpy as jnp
from jax import lax
from jax.experimental import pallas as pl
from jax.experimental.pallas import tpu as pltpu

_EPS = 1e-12  # F.normalize default eps
_MAX_TB = 1024  # max batch-tile rows (bf16 act + f32 out + intermediates << 32 MiB VMEM)


# --------------------------------------------------------------------------- #
# Pallas kernel: one batch tile per grid step
# --------------------------------------------------------------------------- #
def _projection_head_kernel(z_ref, w1_ref, b1_ref, w2_ref, b2_ref, out_ref):
    # Linear 1: bf16 operands on the MXU, f32 accumulation, + bias, ReLU.
    h = jnp.dot(z_ref[...], w1_ref[...],
                preferred_element_type=jnp.float32) + b1_ref[...]
    h = jnp.maximum(h, 0.0)

    # Linear 2.
    y = jnp.dot(h.astype(jnp.bfloat16), w2_ref[...],
                preferred_element_type=jnp.float32) + b2_ref[...]

    # F.normalize(dim=1): y / max(||y||_2, eps) == y * rsqrt(max(ssq, eps^2)).
    ssq = jnp.sum(y * y, axis=-1, keepdims=True)
    inv = lax.rsqrt(jnp.maximum(ssq, _EPS * _EPS))
    out_ref[...] = (y * inv).astype(out_ref.dtype)


# --------------------------------------------------------------------------- #
# One-time parameter packing (hoisted out of the per-call hot path)
# --------------------------------------------------------------------------- #
def prepare_params(params):
    """Transpose torch-layout weights to (in, out), cast to bf16, reshape biases."""
    proj_dim = params['w1'].shape[0]  # torch Linear weight: (out, in)
    return dict(
        w1=jnp.asarray(params['w1']).T.astype(jnp.bfloat16),   # (in_dim, proj_dim)
        w2=jnp.asarray(params['w2']).T.astype(jnp.bfloat16),   # (proj_dim, proj_dim)
        b1=jnp.asarray(params['b1']).reshape(1, proj_dim).astype(jnp.float32),
        b2=jnp.asarray(params['b2']).reshape(1, proj_dim).astype(jnp.float32),
    )


# --------------------------------------------------------------------------- #
# Wrapper: pallas_call with batch-tiled grid
# --------------------------------------------------------------------------- #
def projection_head_pallas(z, packed):
    B, in_dim = z.shape
    proj_dim = packed['w1'].shape[1]

    # bf16 activations: halves the dominant HBM read for this mem-bound kernel.
    z = z.astype(jnp.bfloat16)

    # Batch tile: cover the whole batch in one step when it fits (block shape
    # equal to the full array dim satisfies the (8,128) rule without padding);
    # otherwise a 1024-row tile (multiple of 8) with a masked ragged last block.
    tb = B if B <= _MAX_TB else _MAX_TB
    grid = (pl.cdiv(B, tb),)

    out = pl.pallas_call(
        _projection_head_kernel,
        out_shape=jax.ShapeDtypeStruct((B, proj_dim), jnp.float32),
        grid_spec=pltpu.PrefetchScalarGridSpec(
            num_scalar_prefetch=0,
            grid=grid,
            in_specs=[
                pl.BlockSpec((tb, in_dim), lambda i: (i, 0)),         # activations (bf16)
                pl.BlockSpec((in_dim, proj_dim), lambda i: (0, 0)),   # W1 (resident)
                pl.BlockSpec((1, proj_dim), lambda i: (0, 0)),        # b1
                pl.BlockSpec((proj_dim, proj_dim), lambda i: (0, 0)), # W2 (resident)
                pl.BlockSpec((1, proj_dim), lambda i: (0, 0)),        # b2
            ],
            out_specs=pl.BlockSpec((tb, proj_dim), lambda i: (i, 0)), # lane-dense (128)
        ),
        compiler_params=pltpu.CompilerParams(
            dimension_semantics=("parallel",),      # batch axis shards across TCs
            vmem_limit_bytes=32 * 1024 * 1024,      # tiny footprint; safe on v5e/v6e/v7x
        ),
    )(z, packed['w1'], packed['b1'], packed['w2'], packed['b2'])

    return out


# --------------------------------------------------------------------------- #
# Deterministic parameter init (shapes follow the PyTorch module __init__)
# --------------------------------------------------------------------------- #
def init_params(key, input_dim, proj_dim):
    k1, k2, k3, k4 = jax.random.split(key, 4)

    def lin(kw, kb, fan_in, fan_out):
        bound = 1.0 / (fan_in ** 0.5)
        w = jax.random.uniform(kw, (fan_out, fan_in), jnp.float32, -bound, bound)
        b = jax.random.uniform(kb, (fan_out,), jnp.float32, -bound, bound)
        return w, b

    w1, b1 = lin(k1, k2, input_dim, proj_dim)
    w2, b2 = lin(k3, k4, proj_dim, proj_dim)
    return dict(w1=w1, b1=b1, w2=w2, b2=b2)


# --------------------------------------------------------------------------- #
# Pure-JAX reference (f32) for a correctness check
# --------------------------------------------------------------------------- #
def projection_head_ref(z, params):
    z = z.astype(jnp.float32)
    h = jnp.maximum(z @ params['w1'].T + params['b1'], 0.0)
    y = h @ params['w2'].T + params['b2']
    norm = jnp.sqrt(jnp.sum(y * y, axis=1, keepdims=True))
    return y / jnp.maximum(norm, _EPS)


# --------------------------------------------------------------------------- #
if __name__ == "__main__":
    B, input_dim, proj_dim = 2, 256, 128      # module defaults, small batch

    key = jax.random.PRNGKey(0)
    kx, kp = jax.random.split(key)
    z = jax.random.normal(kx, (B, input_dim), dtype=jnp.float32)
    params = init_params(kp, input_dim, proj_dim)
    packed = prepare_params(params)           # one-time weight prep (off hot path)

    out = projection_head_pallas(z, packed)
    out = jax.block_until_ready(out)

    ref = projection_head_ref(z, params)
    assert out.shape == (B, proj_dim)
    # bf16 matmul operands with f32 accumulation -> small deviation from f32 ref.
    if not bool(jnp.allclose(out, ref, atol=1e-2, rtol=1e-2)):
        raise AssertionError(
            f"kernel/reference mismatch, max abs err = "
            f"{float(jnp.max(jnp.abs(out - ref)))}")

    print("KERNEL_OK")
</pallas_src>

<mosaic_0001>
module attributes {stable_mosaic.version = 11 : i64} {
  func.func @_projection_head_kernel(%arg0: i32, %arg1: memref<2x256xbf16, #tpu.memory_space<vmem>>, %arg2: memref<256x128xbf16, #tpu.memory_space<vmem>>, %arg3: memref<1x128xf32, #tpu.memory_space<vmem>>, %arg4: memref<128x128xbf16, #tpu.memory_space<vmem>>, %arg5: memref<1x128xf32, #tpu.memory_space<vmem>>, %arg6: memref<2x128xf32, #tpu.memory_space<vmem>>) attributes {dimension_semantics = [#tpu.dimension_semantics<parallel>], iteration_bounds = array<i64: 1>, scalar_prefetch = 0 : i64, scratch_operands = 0 : i64, tpu.core_type = #tpu.core_type<tc>, window_params = [{transform_indices = @transform_0, window_bounds = array<i64: 2, 256>}, {pipeline_mode = #tpu.pipeline_mode<synchronous>, transform_indices = @transform_1, window_bounds = array<i64: 256, 128>}, {pipeline_mode = #tpu.pipeline_mode<synchronous>, transform_indices = @transform_2, window_bounds = array<i64: 1, 128>}, {pipeline_mode = #tpu.pipeline_mode<synchronous>, transform_indices = @transform_3, window_bounds = array<i64: 128, 128>}, {pipeline_mode = #tpu.pipeline_mode<synchronous>, transform_indices = @transform_4, window_bounds = array<i64: 1, 128>}, {transform_indices = @transform_5, window_bounds = array<i64: 2, 128>}]} {
    %c0 = arith.constant 0 : index
    %c0_0 = arith.constant 0 : index
    %0 = vector.load %arg1[%c0, %c0_0] : memref<2x256xbf16, #tpu.memory_space<vmem>>, vector<2x256xbf16>
    %c0_1 = arith.constant 0 : index
    %c0_2 = arith.constant 0 : index
    %1 = vector.load %arg2[%c0_1, %c0_2] : memref<256x128xbf16, #tpu.memory_space<vmem>>, vector<256x128xbf16>
    %cst = arith.constant dense<0.000000e+00> : vector<2x128xf32>
    %2 = tpu.matmul %0, %1, %cst {dimension_numbers = #tpu.dot_dimension_numbers<[1], [0], [0], [1], [0, 0, 1, 1], [], []>} : vector<2x256xbf16>, vector<256x128xbf16>, vector<2x128xf32> -> vector<2x128xf32>
    %c0_3 = arith.constant 0 : index
    %c0_4 = arith.constant 0 : index
    %3 = vector.load %arg3[%c0_3, %c0_4] : memref<1x128xf32, #tpu.memory_space<vmem>>, vector<1x128xf32>
    %4 = vector.broadcast %3 : vector<1x128xf32> to vector<2x128xf32>
    %5 = arith.addf %2, %4 : vector<2x128xf32>
    %cst_5 = arith.constant 0.000000e+00 : f32
    %6 = vector.broadcast %cst_5 : f32 to vector<2x128xf32>
    %7 = arith.maximumf %5, %6 : vector<2x128xf32>
    %8 = arith.truncf %7 : vector<2x128xf32> to vector<2x128xbf16>
    %c0_6 = arith.constant 0 : index
    %c0_7 = arith.constant 0 : index
    %9 = vector.load %arg4[%c0_6, %c0_7] : memref<128x128xbf16, #tpu.memory_space<vmem>>, vector<128x128xbf16>
    %cst_8 = arith.constant dense<0.000000e+00> : vector<2x128xf32>
    %10 = tpu.matmul %8, %9, %cst_8 {dimension_numbers = #tpu.dot_dimension_numbers<[1], [0], [0], [1], [0, 0, 1, 1], [], []>} : vector<2x128xbf16>, vector<128x128xbf16>, vector<2x128xf32> -> vector<2x128xf32>
    %c0_9 = arith.constant 0 : index
    %c0_10 = arith.constant 0 : index
    %11 = vector.load %arg5[%c0_9, %c0_10] : memref<1x128xf32, #tpu.memory_space<vmem>>, vector<1x128xf32>
    %12 = vector.broadcast %11 : vector<1x128xf32> to vector<2x128xf32>
    %13 = arith.addf %10, %12 : vector<2x128xf32>
    %14 = arith.mulf %13, %13 : vector<2x128xf32>
    %cst_11 = arith.constant dense<0.000000e+00> : vector<2xf32>
    %15 = vector.multi_reduction <add>, %14, %cst_11 [1] : vector<2x128xf32> to vector<2xf32>
    %16 = vector.shape_cast %15 : vector<2xf32> to vector<2x1xf32>
    %cst_12 = arith.constant 1.000000e-24 : f32
    %17 = vector.broadcast %cst_12 : f32 to vector<2x1xf32>
    %18 = arith.maximumf %16, %17 : vector<2x1xf32>
    %19 = math.rsqrt %18 : vector<2x1xf32>
    %20 = vector.broadcast %19 : vector<2x1xf32> to vector<2x128xf32>
    %21 = arith.mulf %13, %20 : vector<2x128xf32>
    %c0_13 = arith.constant 0 : index
    %c0_14 = arith.constant 0 : index
    %22 = vector.load %arg6[%c0_13, %c0_14] : memref<2x128xf32, #tpu.memory_space<vmem>>, vector<2x128xf32>
    tpu.vector_store %arg6[%c0_13, %c0_14], %21 {strides = array<i32>} : memref<2x128xf32, #tpu.memory_space<vmem>>, vector<2x128xf32>,
    return
  }
  func.func @transform_0(%arg0: i32) -> (i32, i32) {
    %c0_i32 = arith.constant 0 : i32
    %c0_i32_0 = arith.constant 0 : i32
    return %arg0, %c0_i32 : i32, i32
  }
  func.func @transform_1(%arg0: i32) -> (i32, i32) {
    %c0_i32 = arith.constant 0 : i32
    %c0_i32_0 = arith.constant 0 : i32
    %c0_i32_1 = arith.constant 0 : i32
    return %c0_i32, %c0_i32_0 : i32, i32
  }
  func.func @transform_2(%arg0: i32) -> (i32, i32) {
    %c0_i32 = arith.constant 0 : i32
    %c0_i32_0 = arith.constant 0 : i32
    %c0_i32_1 = arith.constant 0 : i32
    return %c0_i32, %c0_i32_0 : i32, i32
  }
  func.func @transform_3(%arg0: i32) -> (i32, i32) {
    %c0_i32 = arith.constant 0 : i32
    %c0_i32_0 = arith.constant 0 : i32
    %c0_i32_1 = arith.constant 0 : i32
    return %c0_i32, %c0_i32_0 : i32, i32
  }
  func.func @transform_4(%arg0: i32) -> (i32, i32) {
    %c0_i32 = arith.constant 0 : i32
    %c0_i32_0 = arith.constant 0 : i32
    %c0_i32_1 = arith.constant 0 : i32
    return %c0_i32, %c0_i32_0 : i32, i32
  }
  func.func @transform_5(%arg0: i32) -> (i32, i32) {
    %c0_i32 = arith.constant 0 : i32
    %c0_i32_0 = arith.constant 0 : i32
    return %arg0, %c0_i32 : i32, i32
  }
}

</mosaic_0001>

<llo_original>
// kernel: tpu_custom_call.1
$region0: #{tpu_custom_call.1}
  #allocation0 [shape = 'u32[]', space=smem, size = 0x4, offset = 0x4, fixed_abs, tag = 'smem constant byte address 0x4 - core index']
  #allocation1 [shape = 'u32[72,128]{1,0:T(1,128)}', space=vmem, size = 0x9000, scoped, tag = 'internal scratch']
  %s0 = inlined_call_operand.hbm [shape: bf16[2,256], index: 0, kind: input, shape index: {}]
  %s1 = inlined_call_operand.hbm [shape: bf16[256,128], index: 1, kind: input, shape index: {}]
  %s2 = inlined_call_operand.vmem [shape: f32[1,128], index: 2, kind: input, shape index: {}]
  %s3 = inlined_call_operand.hbm [shape: bf16[128,128], index: 3, kind: input, shape index: {}]
  %s4 = inlined_call_operand.vmem [shape: f32[1,128], index: 4, kind: input, shape index: {}]
  %s5 = inlined_call_operand.hbm [shape: f32[2,128], index: 5, kind: output, shape index: {}]
  %s6 = sld [smem:[#allocation0]]
  $region42: #{tpu_custom_call.1} parent=0
    _
  %s8 = ssub.s32 1, %s6
  %s9 = scalar_select 0, %s8, %s6
  $region1: #{tpu_custom_call.1} parent=0
    #allocation2 [shape = 'u8[1024]{0}', space=vmem, size = 0x400, scoped, tag = 'input window, operand 0, single buffered']
    #allocation3 [shape = 's32[1]{0}', space=sflag, size = 0x4, scoped, tag = 'scoped memory for tpu_custom_call.1']
    #allocation4 [shape = 's32[1]{0}', space=sflag, size = 0x4, scoped, tag = 'scoped memory for tpu_custom_call.1']
    #allocation5 [shape = 'u8[65536]{0}', space=vmem, size = 0x10000, scoped, tag = 'input window, operand 1, single buffered']
    #allocation6 [shape = 's32[1]{0}', space=sflag, size = 0x4, scoped, tag = 'scoped memory for tpu_custom_call.1']
    #allocation7 [shape = 'u8[32768]{0}', space=vmem, size = 0x8000, scoped, tag = 'input window, operand 3, single buffered']
    #allocation8 [shape = 'u8[1024]{0}', space=vmem, size = 0x400, scoped, tag = 'output window, operand 0, single buffered']
    %10 = vsyncpa [#allocation3], 0
    %11 = vsyncpa [#allocation6], 0
    %12 = vsyncpa [#allocation4], 0
    // Predicated region
    $region2: #{tpu_custom_call.1} parent=1 // pred_check
      _
    $region3: #{tpu_custom_call.1} parent=1 // pred_check_branch
      %14 = sbr.rel (0) target = $region5
    $region4: #{tpu_custom_call.1} parent=1 // pred_region
      %16 = vsyncadd [#allocation3], 0
      %s18 = sshll.u32 %s0, 4
      %s19 = int_to_ptr.hbm [resolvable:$true] %s18
      %s20 = sshll.u32 [#allocation2], 4
      %s21 = int_to_ptr.vmem [resolvable:$true] %s20
      %23 = dma.hbm_to_vmem [thread:$0]  %s19, 32, %s21, [#allocation3]
    $region5: #{tpu_custom_call.1} parent=1 // pred_fallthru
      _
    // Predicated region
    $region6: #{tpu_custom_call.1} parent=1 // pred_check
      _
    $region7: #{tpu_custom_call.1} parent=1 // pred_check_branch
      %25 = sbr.rel (0) target = $region9
    $region8: #{tpu_custom_call.1} parent=1 // pred_region
      %27 = vsyncadd [#allocation6], 0
      %s28 = sshll.u32 %s1, 4
      %s29 = int_to_ptr.hbm [resolvable:$true] %s28
      %s30 = sshll.u32 [#allocation5], 4
      %s31 = int_to_ptr.vmem [resolvable:$true] %s30
      %36 = dma.hbm_to_vmem [thread:$0]  %s29, 2048, %s31, [#allocation6], 64, 64, 4
    $region9: #{tpu_custom_call.1} parent=1 // pred_fallthru
      _
    // Predicated region
    $region10: #{tpu_custom_call.1} parent=1 // pred_check
      _
    $region11: #{tpu_custom_call.1} parent=1 // pred_check_branch
      %38 = sbr.rel (0) target = $region13
    $region12: #{tpu_custom_call.1} parent=1 // pred_region
      _
    $region13: #{tpu_custom_call.1} parent=1 // pred_fallthru
      _
    // Predicated region
    $region14: #{tpu_custom_call.1} parent=1 // pred_check
      _
    $region15: #{tpu_custom_call.1} parent=1 // pred_check_branch
      %40 = sbr.rel (0) target = $region17
    $region16: #{tpu_custom_call.1} parent=1 // pred_region
      %42 = vsyncadd [#allocation6], 0
      %s43 = sshll.u32 %s3, 4
      %s44 = int_to_ptr.hbm [resolvable:$true] %s43
      %s45 = sshll.u32 [#allocation7], 4
      %s46 = int_to_ptr.vmem [resolvable:$true] %s45
      %51 = dma.hbm_to_vmem [thread:$0]  %s44, 1024, %s46, [#allocation6], 64, 64, 4
    $region17: #{tpu_custom_call.1} parent=1 // pred_fallthru
      _
    // Predicated region
    $region18: #{tpu_custom_call.1} parent=1 // pred_check
      _
    $region19: #{tpu_custom_call.1} parent=1 // pred_check_branch
      %53 = sbr.rel (0) target = $region21
    $region20: #{tpu_custom_call.1} parent=1 // pred_region
      _
    $region21: #{tpu_custom_call.1} parent=1 // pred_fallthru
      _
    // Predicated region
    $region22: #{tpu_custom_call.1} parent=1 // pred_check
      _
    $region23: #{tpu_custom_call.1} parent=1 // pred_check_branch
      %55 = sbr.rel (0) target = $region25
    $region24: #{tpu_custom_call.1} parent=1 // pred_region
      %57 = dma.done [#allocation3], 32
    $region25: #{tpu_custom_call.1} parent=1 // pred_fallthru
      _
    // Predicated region
    $region26: #{tpu_custom_call.1} parent=1 // pred_check
      _
    $region27: #{tpu_custom_call.1} parent=1 // pred_check_branch
      %59 = sbr.rel (0) target = $region29
    $region28: #{tpu_custom_call.1} parent=1 // pred_region
      %61 = dma.done [#allocation6], 2048
    $region29: #{tpu_custom_call.1} parent=1 // pred_fallthru
      _
    // Predicated region
    $region30: #{tpu_custom_call.1} parent=1 // pred_check
      _
    $region31: #{tpu_custom_call.1} parent=1 // pred_check_branch
      %63 = sbr.rel (0) target = $region33
    $region32: #{tpu_custom_call.1} parent=1 // pred_region
      %65 = dma.done [#allocation6], 1024
    $region33: #{tpu_custom_call.1} parent=1 // pred_fallthru
      _
    %v66 = vld [vmem:[#allocation2] sm:$0x3]
    %v67 = vld [vmem:[#allocation5] sm:$0xf]
    %v68 = vld [vmem:[#allocation5 + $0x4] sm:$0xf]
    %v69 = vld [vmem:[#allocation5 + $0x8] sm:$0xf]
    %v70 = vld [vmem:[#allocation5 + $0xc] sm:$0xf]
    %v71 = vld [vmem:[#allocation5 + $0x10] sm:$0xf]
    %v72 = vld [vmem:[#allocation5 + $0x14] sm:$0xf]
    %v73 = vld [vmem:[#allocation5 + $0x18] sm:$0xf]
    %v74 = vld [vmem:[#allocation5 + $0x1c] sm:$0xf]
    %v75 = vld [vmem:[#allocation5 + $0x20] sm:$0xf]
    %v76 = vld [vmem:[#allocation5 + $0x24] sm:$0xf]
    %v77 = vld [vmem:[#allocation5 + $0x28] sm:$0xf]
    %v78 = vld [vmem:[#allocation5 + $0x2c] sm:$0xf]
    %v79 = vld [vmem:[#allocation5 + $0x30] sm:$0xf]
    %v80 = vld [vmem:[#allocation5 + $0x34] sm:$0xf]
    %v81 = vld [vmem:[#allocation5 + $0x38] sm:$0xf]
    %v82 = vld [vmem:[#allocation5 + $0x3c] sm:$0xf]
    %v83 = vld [vmem:[#allocation5 + $0x40] sm:$0xf]
    %v84 = vld [vmem:[#allocation5 + $0x44] sm:$0xf]
    %v85 = vld [vmem:[#allocation5 + $0x48] sm:$0xf]
    %v86 = vld [vmem:[#allocation5 + $0x4c] sm:$0xf]
    %v87 = vld [vmem:[#allocation5 + $0x50] sm:$0xf]
    %v88 = vld [vmem:[#allocation5 + $0x54] sm:$0xf]
    %v89 = vld [vmem:[#allocation5 + $0x58] sm:$0xf]
    %v90 = vld [vmem:[#allocation5 + $0x5c] sm:$0xf]
    %v91 = vld [vmem:[#allocation5 + $0x60] sm:$0xf]
    %v92 = vld [vmem:[#allocation5 + $0x64] sm:$0xf]
    %v93 = vld [vmem:[#allocation5 + $0x68] sm:$0xf]
    %v94 = vld [vmem:[#allocation5 + $0x6c] sm:$0xf]
    %v95 = vld [vmem:[#allocation5 + $0x70] sm:$0xf]
    %v96 = vld [vmem:[#allocation5 + $0x74] sm:$0xf]
    %v97 = vld [vmem:[#allocation5 + $0x78] sm:$0xf]
    %v98 = vld [vmem:[#allocation5 + $0x7c] sm:$0xf]
    %v99 = vld [vmem:[%s2] sm:$0x1]
    %v101 = vperm.slane %v99, 0
    %104 = vst [vmem:[#allocation1] ss:$9 sm:$0xff] %v66
    %v105 = vld [vmem:[#allocation1] sm:$0xff]
    %v106 = vld [vmem:[#allocation1 + $0x9] sm:$0xff]
    %v141 = vunpack.c.l.b16 %v67
    %v142 = vunpack.c.l.b16 %v68
    %v143 = vunpack.c.l.b16 %v69
    %v144 = vunpack.c.l.b16 %v70
    %v145 = vunpack.c.l.b16 %v71
    %v146 = vunpack.c.l.b16 %v72
    %v147 = vunpack.c.l.b16 %v73
    %v148 = vunpack.c.l.b16 %v74
    %v149 = vunpack.c.l.b16 %v75
    %v150 = vunpack.c.l.b16 %v76
    %v151 = vunpack.c.l.b16 %v77
    %v152 = vunpack.c.l.b16 %v78
    %v153 = vunpack.c.l.b16 %v79
    %v154 = vunpack.c.l.b16 %v80
    %v155 = vunpack.c.l.b16 %v81
    %v156 = vunpack.c.l.b16 %v82
    %v157 = vunpack.c.l.b16 %v83
    %v158 = vunpack.c.l.b16 %v84
    %v159 = vunpack.c.l.b16 %v85
    %v160 = vunpack.c.l.b16 %v86
    %v161 = vunpack.c.l.b16 %v87
    %v162 = vunpack.c.l.b16 %v88
    %v163 = vunpack.c.l.b16 %v89
    %v164 = vunpack.c.l.b16 %v90
    %v165 = vunpack.c.l.b16 %v91
    %v166 = vunpack.c.l.b16 %v92
    %v167 = vunpack.c.l.b16 %v93
    %v168 = vunpack.c.l.b16 %v94
    %v169 = vunpack.c.l.b16 %v95
    %v170 = vunpack.c.l.b16 %v96
    %v171 = vunpack.c.l.b16 %v97
    %v172 = vunpack.c.l.b16 %v98
    %v173 = vpack.c.b16 %v142, %v141
    %v174 = vpack.c.b16 %v144, %v143
    %v175 = vpack.c.b16 %v146, %v145
    %v176 = vpack.c.b16 %v148, %v147
    %v177 = vpack.c.b16 %v150, %v149
    %v178 = vpack.c.b16 %v152, %v151
    %v179 = vpack.c.b16 %v154, %v153
    %v180 = vpack.c.b16 %v156, %v155
    %v181 = vpack.c.b16 %v158, %v157
    %v182 = vpack.c.b16 %v160, %v159
    %v183 = vpack.c.b16 %v162, %v161
    %v184 = vpack.c.b16 %v164, %v163
    %v185 = vpack.c.b16 %v166, %v165
    %v186 = vpack.c.b16 %v168, %v167
    %v187 = vpack.c.b16 %v170, %v169
    %v188 = vpack.c.b16 %v172, %v171
    %205 = vmatpush.bf16.msra.mxu0 %v180
    %206 = vmatpush.bf16.msra.mxu0 %v179
    %207 = vmatpush.bf16.msra.mxu0 %v178
    %208 = vmatpush.bf16.msra.mxu0 %v177
    %209 = vmatpush.bf16.msra.mxu0 %v176
    %210 = vmatpush.bf16.msra.mxu0 %v175
    %211 = vmatpush.bf16.msra.mxu0 %v174
    %212 = vmatpush.bf16.msra.mxu0 %v173
    %213 = vmatmul.bf16.gmra.mxu0 %v105
    %v214 = vpop.f32.mrf.mxu0
    %v215 = vadd.f32 %v101, %v214
    %v216 = vpop.f32.mrf.mxu0
    %217 = vdwg.mxu0
    %218 = vmatpush.bf16.msra.mxu0 %v188
    %219 = vmatpush.bf16.msra.mxu0 %v187
    %220 = vmatpush.bf16.msra.mxu0 %v186
    %221 = vmatpush.bf16.msra.mxu0 %v185
    %222 = vmatpush.bf16.msra.mxu0 %v184
    %223 = vmatpush.bf16.msra.mxu0 %v183
    %224 = vmatpush.bf16.msra.mxu0 %v182
    %225 = vmatpush.bf16.msra.mxu0 %v181
    %226 = vmatmul.bf16.gmra.mxu0 %v106
    %v227 = vpop.f32.mrf.mxu0
    %v228 = vadd.f32 %v215, %v227
    %v229 = vpop.f32.mrf.mxu0
    %230 = vdwg.mxu0
    %v231 = vmax.f32 %v228, 0.0
    %v232 = vpack.c.bf16 %v231, %v231
    %v233 = vld [vmem:[#allocation7] sm:$0xf]
    %v234 = vld [vmem:[#allocation7 + $0x4] sm:$0xf]
    %v235 = vld [vmem:[#allocation7 + $0x8] sm:$0xf]
    %v236 = vld [vmem:[#allocation7 + $0xc] sm:$0xf]
    %v237 = vld [vmem:[#allocation7 + $0x10] sm:$0xf]
    %v238 = vld [vmem:[#allocation7 + $0x14] sm:$0xf]
    %v239 = vld [vmem:[#allocation7 + $0x18] sm:$0xf]
    %v240 = vld [vmem:[#allocation7 + $0x1c] sm:$0xf]
    %v241 = vld [vmem:[#allocation7 + $0x20] sm:$0xf]
    %v242 = vld [vmem:[#allocation7 + $0x24] sm:$0xf]
    %v243 = vld [vmem:[#allocation7 + $0x28] sm:$0xf]
    %v244 = vld [vmem:[#allocation7 + $0x2c] sm:$0xf]
    %v245 = vld [vmem:[#allocation7 + $0x30] sm:$0xf]
    %v246 = vld [vmem:[#allocation7 + $0x34] sm:$0xf]
    %v247 = vld [vmem:[#allocation7 + $0x38] sm:$0xf]
    %v248 = vld [vmem:[#allocation7 + $0x3c] sm:$0xf]
    %v249 = vld [vmem:[%s4] sm:$0x1]
    %v251 = vperm.slane %v249, 0
    %v269 = vunpack.c.l.b16 %v233
    %v270 = vunpack.c.l.b16 %v234
    %v271 = vunpack.c.l.b16 %v235
    %v272 = vunpack.c.l.b16 %v236
    %v273 = vunpack.c.l.b16 %v237
    %v274 = vunpack.c.l.b16 %v238
    %v275 = vunpack.c.l.b16 %v239
    %v276 = vunpack.c.l.b16 %v240
    %v277 = vunpack.c.l.b16 %v241
    %v278 = vunpack.c.l.b16 %v242
    %v279 = vunpack.c.l.b16 %v243
    %v280 = vunpack.c.l.b16 %v244
    %v281 = vunpack.c.l.b16 %v245
    %v282 = vunpack.c.l.b16 %v246
    %v283 = vunpack.c.l.b16 %v247
    %v284 = vunpack.c.l.b16 %v248
    %v285 = vpack.c.b16 %v270, %v269
    %v286 = vpack.c.b16 %v272, %v271
    %v287 = vpack.c.b16 %v274, %v273
    %v288 = vpack.c.b16 %v276, %v275
    %v289 = vpack.c.b16 %v278, %v277
    %v290 = vpack.c.b16 %v280, %v279
    %v291 = vpack.c.b16 %v282, %v281
    %v292 = vpack.c.b16 %v284, %v283
    %301 = vmatpush.bf16.msra.mxu0 %v292
    %302 = vmatpush.bf16.msra.mxu0 %v291
    %303 = vmatpush.bf16.msra.mxu0 %v290
    %304 = vmatpush.bf16.msra.mxu0 %v289
    %305 = vmatpush.bf16.msra.mxu0 %v288
    %306 = vmatpush.bf16.msra.mxu0 %v287
    %307 = vmatpush.bf16.msra.mxu0 %v286
    %308 = vmatpush.bf16.msra.mxu0 %v285
    %309 = vmatmul.bf16.gmra.mxu0 %v232
    %v310 = vpop.f32.mrf.mxu0
    %v311 = vadd.f32 %v251, %v310
    %v312 = vpop.f32.mrf.mxu0
    %313 = vdwg.mxu0
    %v314 = vmul.f32 %v311, %v311
    %vm315 = vcmask 1041408
    %v316 = vsel %vm315, %v314, 0.0
    %317 = vadd.xlane.f32.xlu0 %v316
    %v318 = vpop.xlane.xlu0 %317
    %v319 = vmax.f32 %v318, 1e-24
    %v320 = vrsqrt.pop %v319
    %v321 = vmul.f32 %v320, %v319
    %v322 = vmul.f32 %v321, %v320
    %v323 = vmul.f32 0.5, %v322
    %v324 = vsub.f32 1.5, %v323
    %v325 = vmul.f32 %v320, %v324
    %vm326 = vweird.f32 %v319
    %vm327 = vweird.f32 %v320
    %vm328 = vmor %vm326, %vm327
    %v329 = vsel %vm328, %v320, %v325
    %v330 = vmul.f32 %v311, %v329
    %331 = vst [vmem:[#allocation8] sm:$0x3] %v330
    // Predicated region
    $region34: #{tpu_custom_call.1} parent=1 // pred_check
      _
    $region35: #{tpu_custom_call.1} parent=1 // pred_check_branch
      %333 = sbr.rel (0) target = $region37
    $region36: #{tpu_custom_call.1} parent=1 // pred_region
      %335 = vsyncadd [#allocation4], 0
      %s337 = sshll.u32 [#allocation8], 4
      %s338 = int_to_ptr.vmem [resolvable:$true] %s337
      %s339 = sshll.u32 %s5, 4
      %s340 = int_to_ptr.hbm [resolvable:$true] %s339
      %342 = dma.vmem_to_hbm [thread:$0]  %s338, 32, %s340, [#allocation4]
    $region37: #{tpu_custom_call.1} parent=1 // pred_fallthru
      _
    // Predicated region
    $region38: #{tpu_custom_call.1} parent=1 // pred_check
      _
    $region39: #{tpu_custom_call.1} parent=1 // pred_check_branch
      %344 = sbr.rel (0) target = $region41
    $region40: #{tpu_custom_call.1} parent=1 // pred_region
      %346 = dma.done [#allocation4], 32
    $region41: #{tpu_custom_call.1} parent=1 // pred_fallthru
      _
    %347 = vsyncpa [#allocation3], 1
    %348 = vsyncpa [#allocation6], 1
    %349 = vsyncpa [#allocation4], 1

</llo_original>
